<compile_context>
chip_gen: v7x
topology: tpu7x:2x2x1
jax: 0.10.0
libtpu: 0.0.40
codegen_flags: <defaults>
</compile_context>

<pallas_src>
import jax
import jax.numpy as jnp
from jax.experimental import pallas as pl
from jax.experimental.pallas import tpu as pltpu

EPS = 1e-10


def _round_up(x, m):
    return ((x + m - 1) // m) * m


def _l2norm_kernel(x_ref, w_ref, o_ref):
    # x_ref: (NB, C, HW_T) tile; w_ref: (C, 1) VMEM-resident; o_ref like x_ref.
    x = x_ref[...].astype(jnp.float32)
    # Sum of squares over the channel axis (dim=1 in NCHW), keepdim=True.
    ssq = jnp.sum(x * x, axis=1, keepdims=True)                 # (NB, 1, HW_T)
    # One reciprocal per lane column instead of C*HW_T per-element divides.
    # eps is added AFTER the sqrt to match PyTorch's `sqrt(sum) + eps`.
    inv = pl.reciprocal(jnp.sqrt(ssq) + EPS, approx=False)      # (NB, 1, HW_T)
    w = w_ref[...].astype(jnp.float32)[None, :, :]              # (1, C, 1)
    o_ref[...] = (w * (x * inv)).astype(o_ref.dtype)


def l2norm(x_nchw, weight, *, lane_tile=512, tile_bytes_budget=2 * 1024 * 1024):
    """x_nchw: (N, C, H, W); weight: (C,).  Returns (N, C, H, W)."""
    N, C, H, W = x_nchw.shape
    HW = H * W
    itemsize = jnp.dtype(x_nchw.dtype).itemsize

    # Lane-dense tiling of the spatial axis: a multiple of 128 (pad + slice).
    hw_tile = min(lane_tile, _round_up(HW, 128))
    hw_pad = _round_up(HW, hw_tile)

    # Fuse several batch elements per block to amortize per-grid-step
    # overhead, sized against a per-tile VMEM budget (in + out are each
    # double-buffered by the BlockSpec pipeline).
    per_batch_bytes = C * hw_tile * itemsize
    nb = max(1, min(N, tile_bytes_budget // max(1, per_batch_bytes)))
    n_pad = _round_up(N, nb)

    x_flat = x_nchw.reshape(N, C, HW)
    if (n_pad, hw_pad) != (N, HW):
        # Zero padding is safe: padded columns give norm = eps, x/eps = 0.
        x_flat = jnp.pad(x_flat, ((0, n_pad - N), (0, 0), (0, hw_pad - HW)))
    w_col = weight.reshape(C, 1)

    grid = (n_pad // nb, hw_pad // hw_tile)

    out_flat = pl.pallas_call(
        _l2norm_kernel,
        out_shape=jax.ShapeDtypeStruct((n_pad, C, hw_pad), x_nchw.dtype),
        grid_spec=pltpu.PrefetchScalarGridSpec(
            num_scalar_prefetch=0,
            grid=grid,
            in_specs=[
                # x tile: full C (reduced axis) in the block, lane-dense HW tile.
                pl.BlockSpec((nb, C, hw_tile), lambda bi, hi: (bi, 0, hi)),
                # weight: resident once in VMEM, not re-DMA'd per grid step.
                pl.BlockSpec(memory_space=pltpu.MemorySpace.VMEM),
            ],
            out_specs=pl.BlockSpec((nb, C, hw_tile), lambda bi, hi: (bi, 0, hi)),
        ),
        compiler_params=pltpu.CompilerParams(
            dimension_semantics=("parallel", "parallel"),
        ),
    )(x_flat, w_col)

    return out_flat[:N, :, :HW].reshape(N, C, H, W)


if __name__ == "__main__":
    # Deterministic parameter init, mirroring L2Norm.__init__:
    #   n_channels=4, scale (gamma)=20.0 -> weight = full((C,), 20.0)
    N, C, H, W = 2, 4, 16, 16
    gamma = 20.0
    weight = jnp.full((C,), gamma, dtype=jnp.float32)

    key = jax.random.PRNGKey(0)
    x = jax.random.normal(key, (N, C, H, W), dtype=jnp.float32)

    out = l2norm(x, weight)
    out = jax.block_until_ready(out)

    # Reference check in plain JAX (same math as the PyTorch forward).
    norm_ref = jnp.sqrt(jnp.sum(x * x, axis=1, keepdims=True)) + EPS
    ref = weight[None, :, None, None] * (x / norm_ref)
    assert out.shape == (N, C, H, W)
    assert jnp.allclose(out, ref, atol=1e-5, rtol=1e-5)

    print("KERNEL_OK")
</pallas_src>

<mosaic_0001>
module attributes {stable_mosaic.version = 11 : i64} {
  func.func @_l2norm_kernel(%arg0: i32, %arg1: i32, %arg2: memref<2x4x256xf32, #tpu.memory_space<vmem>>, %arg3: memref<4x1xf32, #tpu.memory_space<vmem>>, %arg4: memref<2x4x256xf32, #tpu.memory_space<vmem>>) attributes {dimension_semantics = [#tpu.dimension_semantics<parallel>, #tpu.dimension_semantics<parallel>], iteration_bounds = array<i64: 1, 1>, scalar_prefetch = 0 : i64, scratch_operands = 0 : i64, tpu.core_type = #tpu.core_type<tc>, window_params = [{transform_indices = @transform_0, window_bounds = array<i64: 2, 4, 256>}, {pipeline_mode = #tpu.pipeline_mode<synchronous>, transform_indices = @transform_1, window_bounds = array<i64: 4, 1>}, {transform_indices = @transform_2, window_bounds = array<i64: 2, 4, 256>}]} {
    %c0 = arith.constant 0 : index
    %c0_0 = arith.constant 0 : index
    %c0_1 = arith.constant 0 : index
    %0 = vector.load %arg2[%c0, %c0_0, %c0_1] : memref<2x4x256xf32, #tpu.memory_space<vmem>>, vector<2x4x256xf32>
    %1 = arith.mulf %0, %0 : vector<2x4x256xf32>
    %cst = arith.constant dense<0.000000e+00> : vector<2x256xf32>
    %2 = vector.multi_reduction <add>, %1, %cst [1] : vector<2x4x256xf32> to vector<2x256xf32>
    %3 = vector.shape_cast %2 : vector<2x256xf32> to vector<2x1x256xf32>
    %4 = math.sqrt %3 : vector<2x1x256xf32>
    %cst_2 = arith.constant 1.000000e-10 : f32
    %5 = vector.broadcast %cst_2 : f32 to vector<2x1x256xf32>
    %6 = arith.addf %4, %5 : vector<2x1x256xf32>
    %7 = tpu.reciprocal %6 : vector<2x1x256xf32> -> vector<2x1x256xf32>
    %c0_3 = arith.constant 0 : index
    %c0_4 = arith.constant 0 : index
    %8 = vector.load %arg3[%c0_3, %c0_4] : memref<4x1xf32, #tpu.memory_space<vmem>>, vector<4x1xf32>
    %9 = vector.shape_cast %8 : vector<4x1xf32> to vector<1x4x1xf32>
    %10 = vector.broadcast %7 : vector<2x1x256xf32> to vector<2x4x256xf32>
    %11 = arith.mulf %0, %10 : vector<2x4x256xf32>
    %12 = vector.broadcast %9 : vector<1x4x1xf32> to vector<2x4x256xf32>
    %13 = arith.mulf %12, %11 : vector<2x4x256xf32>
    %c0_5 = arith.constant 0 : index
    %c0_6 = arith.constant 0 : index
    %c0_7 = arith.constant 0 : index
    %14 = vector.load %arg4[%c0_5, %c0_6, %c0_7] : memref<2x4x256xf32, #tpu.memory_space<vmem>>, vector<2x4x256xf32>
    tpu.vector_store %arg4[%c0_5, %c0_6, %c0_7], %13 {strides = array<i32>} : memref<2x4x256xf32, #tpu.memory_space<vmem>>, vector<2x4x256xf32>,
    return
  }
  func.func @transform_0(%arg0: i32, %arg1: i32) -> (i32, i32, i32) {
    %c0_i32 = arith.constant 0 : i32
    %c0_i32_0 = arith.constant 0 : i32
    return %arg0, %c0_i32, %arg1 : i32, i32, i32
  }
  func.func @transform_1(%arg0: i32, %arg1: i32) -> (i32, i32) {
    %c0_i32 = arith.constant 0 : i32
    %c0_i32_0 = arith.constant 0 : i32
    %c0_i32_1 = arith.constant 0 : i32
    return %c0_i32, %c0_i32_0 : i32, i32
  }
  func.func @transform_2(%arg0: i32, %arg1: i32) -> (i32, i32, i32) {
    %c0_i32 = arith.constant 0 : i32
    %c0_i32_0 = arith.constant 0 : i32
    return %arg0, %c0_i32, %arg1 : i32, i32, i32
  }
}

</mosaic_0001>

<llo_original>
// kernel: tpu_custom_call.1
$region0: #{tpu_custom_call.1}
  #allocation0 [shape = 'u32[]', space=smem, size = 0x4, offset = 0x4, fixed_abs, tag = 'smem constant byte address 0x4 - core index']
  #allocation1 [shape = 'u32[144,128]{1,0:T(1,128)}', space=vmem, size = 0x12000, scoped, tag = 'internal scratch']
  %s0 = inlined_call_operand.hbm [shape: f32[2,4,256], index: 0, kind: input, shape index: {}]
  %s1 = inlined_call_operand.vmem [shape: f32[4,1], index: 1, kind: input, shape index: {}]
  %s2 = inlined_call_operand.hbm [shape: f32[2,4,256], index: 2, kind: output, shape index: {}]
  %s3 = sld [smem:[#allocation0]]
  $region22: #{tpu_custom_call.1} parent=0
    _
  %s5 = ssub.s32 1, %s3
  %s6 = scalar_select 0, %s5, %s3
  $region1: #{tpu_custom_call.1} parent=0
    #allocation2 [shape = 'u8[8192]{0}', space=vmem, size = 0x2000, scoped, tag = 'input window, operand 0, single buffered']
    #allocation3 [shape = 's32[1]{0}', space=sflag, size = 0x4, scoped, tag = 'scoped memory for tpu_custom_call.1']
    #allocation4 [shape = 's32[1]{0}', space=sflag, size = 0x4, scoped, tag = 'scoped memory for tpu_custom_call.1']
    #allocation5 [shape = 'u8[8192]{0}', space=vmem, size = 0x2000, scoped, tag = 'output window, operand 0, single buffered']
    %7 = vsyncpa [#allocation3], 0
    %8 = vsyncpa [#allocation4], 0
    // Predicated region
    $region2: #{tpu_custom_call.1} parent=1 // pred_check
      _
    $region3: #{tpu_custom_call.1} parent=1 // pred_check_branch
      %10 = sbr.rel (0) target = $region5
    $region4: #{tpu_custom_call.1} parent=1 // pred_region
      %s12 = ssub.s32 256, 256
      %13 = vsyncadd [#allocation3], %s12
      %s14 = sshll.u32 [#allocation2], 4
      %s15 = int_to_ptr.vmem [resolvable:$true] %s14
      %20 = dma.hbm_to_vmem [thread:$0]  %s0, 256, %s15, [#allocation3], 128, 128, 8
    $region5: #{tpu_custom_call.1} parent=1 // pred_fallthru
      _
    // Predicated region
    $region6: #{tpu_custom_call.1} parent=1 // pred_check
      _
    $region7: #{tpu_custom_call.1} parent=1 // pred_check_branch
      %22 = sbr.rel (0) target = $region9
    $region8: #{tpu_custom_call.1} parent=1 // pred_region
      _
    $region9: #{tpu_custom_call.1} parent=1 // pred_fallthru
      _
    // Predicated region
    $region10: #{tpu_custom_call.1} parent=1 // pred_check
      _
    $region11: #{tpu_custom_call.1} parent=1 // pred_check_branch
      %24 = sbr.rel (0) target = $region13
    $region12: #{tpu_custom_call.1} parent=1 // pred_region
      %25 = dma.done [#allocation3], 256
    $region13: #{tpu_custom_call.1} parent=1 // pred_fallthru
      _
    %v26 = vld [vmem:[#allocation2] sm:$0xff]
    %v27 = vld [vmem:[#allocation2 + $0x8] sm:$0xff]
    %v28 = vmul.f32 %v26, %v26
    %v29 = vmul.f32 %v27, %v27
    %v32 = vcombine.high %v28, %v28
    %v33 = vcombine.high %v29, %v29
    %vm36 = vcmask 1043456
    %v37 = vsel %vm36, %v28, 0.0
    %v38 = vrot.slane %v37, 4
    %v39 = vadd.f32 %v37, %v38
    %v40 = vrot.slane %v39, 2
    %v41 = vadd.f32 %v39, %v40
    %v42 = vrot.slane %v41, 1
    %v43 = vadd.f32 %v41, %v42
    %v44 = vsel %vm36, %v32, 0.0
    %v45 = vrot.slane %v44, 4
    %v46 = vadd.f32 %v44, %v45
    %v47 = vrot.slane %v46, 2
    %v48 = vadd.f32 %v46, %v47
    %v49 = vrot.slane %v48, 1
    %v50 = vadd.f32 %v48, %v49
    %v51 = vsel %vm36, %v29, 0.0
    %v52 = vrot.slane %v51, 4
    %v53 = vadd.f32 %v51, %v52
    %v54 = vrot.slane %v53, 2
    %v55 = vadd.f32 %v53, %v54
    %v56 = vrot.slane %v55, 1
    %v57 = vadd.f32 %v55, %v56
    %v58 = vsel %vm36, %v33, 0.0
    %v59 = vrot.slane %v58, 4
    %v60 = vadd.f32 %v58, %v59
    %v61 = vrot.slane %v60, 2
    %v62 = vadd.f32 %v60, %v61
    %v63 = vrot.slane %v62, 1
    %v64 = vadd.f32 %v62, %v63
    %v65 = vrsqrt.pop %v43
    %v66 = vmul.f32 %v43, %v65
    %vm67 = vcmp.eq.f32.partialorder %v43, inf
    %v68 = vsel %vm67, %v43, %v66
    %vm69 = vcmp.eq.f32.partialorder %v43, 0.0
    %v70 = vand.u32 %v43, 2147483648
    %v71 = vsel %vm69, %v70, %v68
    %v72 = vrsqrt.pop %v50
    %v73 = vmul.f32 %v50, %v72
    %vm74 = vcmp.eq.f32.partialorder %v50, inf
    %v75 = vsel %vm74, %v50, %v73
    %vm76 = vcmp.eq.f32.partialorder %v50, 0.0
    %v77 = vand.u32 %v50, 2147483648
    %v78 = vsel %vm76, %v77, %v75
    %v79 = vrsqrt.pop %v57
    %v80 = vmul.f32 %v57, %v79
    %vm81 = vcmp.eq.f32.partialorder %v57, inf
    %v82 = vsel %vm81, %v57, %v80
    %vm83 = vcmp.eq.f32.partialorder %v57, 0.0
    %v84 = vand.u32 %v57, 2147483648
    %v85 = vsel %vm83, %v84, %v82
    %v86 = vrsqrt.pop %v64
    %v87 = vmul.f32 %v64, %v86
    %vm88 = vcmp.eq.f32.partialorder %v64, inf
    %v89 = vsel %vm88, %v64, %v87
    %vm90 = vcmp.eq.f32.partialorder %v64, 0.0
    %v91 = vand.u32 %v64, 2147483648
    %v92 = vsel %vm90, %v91, %v89
    %v93 = vadd.f32 %v71, 1e-10
    %v94 = vadd.f32 %v78, 1e-10
    %v95 = vadd.f32 %v85, 1e-10
    %v96 = vadd.f32 %v92, 1e-10
    %v97 = vrcp.pop %v93
    %v98 = vrcp.pop %v94
    %v99 = vrcp.pop %v95
    %v100 = vrcp.pop %v96
    %v101 = vld [vmem:[%s1] sm:$0xf]
    %v106 = vcombine.low %v97, %v98
    %v107 = vcombine.low %v99, %v100
    %v110 = vmul.f32 %v26, %v106
    %v111 = vmul.f32 %v27, %v107
    %113 = vset.pattern.permute.xlu0 0
    %114 = vperm.xlu0 %113, %v101
    %v115 = vpop.permute.xlu0 %114
    %v119 = vcombine.high %v110, %v110
    %v120 = vcombine.high %v111, %v111
    %v123 = vmul.f32 %v115, %v110
    %v124 = vmul.f32 %v115, %v119
    %v125 = vmul.f32 %v115, %v111
    %v126 = vmul.f32 %v115, %v120
    %v131 = vcombine.low %v123, %v124
    %v132 = vcombine.low %v125, %v126
    %135 = vst [vmem:[#allocation5] sm:$0xff] %v131
    %136 = vst [vmem:[#allocation5 + $0x8] sm:$0xff] %v132
    // Predicated region
    $region14: #{tpu_custom_call.1} parent=1 // pred_check
      _
    $region15: #{tpu_custom_call.1} parent=1 // pred_check_branch
      %138 = sbr.rel (0) target = $region17
    $region16: #{tpu_custom_call.1} parent=1 // pred_region
      %s140 = ssub.s32 256, 256
      %141 = vsyncadd [#allocation4], %s140
      %s142 = sshll.u32 [#allocation5], 4
      %s143 = int_to_ptr.vmem [resolvable:$true] %s142
      %148 = dma.vmem_to_hbm [thread:$0]  %s143, 256, %s2, [#allocation4], 128, 128, 8
    $region17: #{tpu_custom_call.1} parent=1 // pred_fallthru
      _
    // Predicated region
    $region18: #{tpu_custom_call.1} parent=1 // pred_check
      _
    $region19: #{tpu_custom_call.1} parent=1 // pred_check_branch
      %150 = sbr.rel (0) target = $region21
    $region20: #{tpu_custom_call.1} parent=1 // pred_region
      %151 = dma.done [#allocation4], 256
    $region21: #{tpu_custom_call.1} parent=1 // pred_fallthru
      _
    %152 = vsyncpa [#allocation3], 1
    %153 = vsyncpa [#allocation4], 1

</llo_original>
